<compile_context>
chip_gen: v5e
topology: v5e:2x2
jax: 0.10.0
libtpu: 0.0.40
codegen_flags: <defaults>
</compile_context>

<pallas_src>
import math

import jax
import jax.numpy as jnp
from jax import lax
from jax.experimental import pallas as pl
from jax.experimental.pallas import tpu as pltpu


def _attention_kernel(scale_ref, a_ref, b_ref, la_ref, lb_ref):
    """One grid step = one (batch, M-tile, N-tile) cell.

    a_ref: (1, tm, D), b_ref: (1, tn, D)
    la_ref: (1, tm, tn)  = scale * A_tile @ B_tile^T  (contraction on last dims)
    lb_ref: (1, tn, tm)  = scale * B_tile @ A_tile^T  (transposed logits,
                            produced directly -- no XLU transpose)
    """
    scale = scale_ref[0]                                    # SMEM scalar
    a = a_ref[0]                                            # (tm, D)
    b = b_ref[0]                                            # (tn, D)

    dn = (((1,), (1,)), ((), ()))                           # contract last dims
    logits_a = lax.dot_general(a, b, dimension_numbers=dn,
                               preferred_element_type=jnp.float32)
    logits_b = lax.dot_general(b, a, dimension_numbers=dn,
                               preferred_element_type=jnp.float32)

    la_ref[0] = (scale * logits_a).astype(la_ref.dtype)
    lb_ref[0] = (scale * logits_b).astype(lb_ref.dtype)


def attention_layer_forward(A, B, logit_scale, *, tm=None, tn=None):
    """exp(logit_scale) * bmm(A, B^T) and its (1,2)-transpose, one pallas_call.

    A: (Bn, M, D), B: (Bn, N, D)
    tm/tn: optional M/N tile sizes for production shapes (must be multiples of
           (8, 128) when smaller than the full extent). Default: full extent.
    """
    Bn, M, D = A.shape
    Bn2, N, D2 = B.shape
    assert Bn2 == Bn and D2 == D

    tm = M if tm is None else min(tm, M)
    tn = N if tn is None else min(tn, N)
    grid = (Bn, pl.cdiv(M, tm), pl.cdiv(N, tn))

    out_dtype = jnp.promote_types(A.dtype, B.dtype)
    scale = jnp.exp(logit_scale).reshape((1,)).astype(jnp.float32)

    itemsize_in = jnp.dtype(A.dtype).itemsize
    itemsize_out = jnp.dtype(out_dtype).itemsize
    cost = pl.CostEstimate(
        flops=2 * (2 * Bn * M * N * D),          # two MXU matmuls per tile pair
        transcendentals=0,
        bytes_accessed=(Bn * M * D + Bn * N * D) * itemsize_in
        + 2 * Bn * M * N * itemsize_out,
    )

    la, lb = pl.pallas_call(
        _attention_kernel,
        out_shape=(
            jax.ShapeDtypeStruct((Bn, M, N), out_dtype),
            jax.ShapeDtypeStruct((Bn, N, M), out_dtype),
        ),
        grid_spec=pltpu.PrefetchScalarGridSpec(
            num_scalar_prefetch=1,                           # exp(logit_scale) -> SMEM
            grid=grid,
            in_specs=[
                pl.BlockSpec((1, tm, D), lambda b, i, j, s: (b, i, 0)),
                pl.BlockSpec((1, tn, D), lambda b, i, j, s: (b, j, 0)),
            ],
            out_specs=[
                pl.BlockSpec((1, tm, tn), lambda b, i, j, s: (b, i, j)),
                pl.BlockSpec((1, tn, tm), lambda b, i, j, s: (b, j, i)),
            ],
        ),
        compiler_params=pltpu.CompilerParams(
            # No cross-step carry anywhere -> every axis independent; v7x's two
            # TensorCores can split the batch axis.
            dimension_semantics=("parallel", "parallel", "parallel"),
        ),
        cost_estimate=cost,
    )(scale, A, B)

    return la, lb


class AttentionLayerPallas:
    """JAX/Pallas port of AttentionLayer (forward semantics only)."""

    def __init__(self):
        # nn.Parameter(torch.ones([]) * np.log(1 / 0.07))
        self.logit_scale = jnp.asarray(math.log(1.0 / 0.07), jnp.float32)

    def __call__(self, A, B):
        return attention_layer_forward(A, B, self.logit_scale)


def _reference(A, B, logit_scale):
    """Pure-JAX reference for a sanity check."""
    logits_A = jnp.exp(logit_scale) * jnp.einsum("bmd,bnd->bmn", A, B)
    logits_B = jnp.swapaxes(logits_A, 1, 2)
    return logits_A, logits_B


if __name__ == "__main__":
    key = jax.random.PRNGKey(0)
    kA, kB = jax.random.split(key, 2)

    # Small shapes consistent with the module: batch=2, M=16, N=8, D=32.
    Bn, M, N, D = 2, 16, 8, 32
    A = jax.random.normal(kA, (Bn, M, D), jnp.float32)
    B = jax.random.normal(kB, (Bn, N, D), jnp.float32)

    layer = AttentionLayerPallas()
    logits_A, logits_B = layer(A, B)
    logits_A = jax.block_until_ready(logits_A)
    logits_B = jax.block_until_ready(logits_B)

    ref_A, ref_B = _reference(A, B, layer.logit_scale)
    assert logits_A.shape == (Bn, M, N) and logits_B.shape == (Bn, N, M)
    assert jnp.allclose(logits_A, ref_A, rtol=1e-5, atol=1e-5)
    assert jnp.allclose(logits_B, ref_B, rtol=1e-5, atol=1e-5)
    assert jnp.allclose(logits_B, jnp.swapaxes(logits_A, 1, 2), rtol=1e-6, atol=1e-6)

    print("KERNEL_OK")
</pallas_src>

<mosaic_0001>
module attributes {stable_mosaic.version = 11 : i64} {
  func.func @_attention_kernel(%arg0: i32, %arg1: i32, %arg2: i32, %arg3: memref<1xf32, #tpu.memory_space<smem>>, %arg4: memref<1x16x32xf32, #tpu.memory_space<vmem>>, %arg5: memref<1x8x32xf32, #tpu.memory_space<vmem>>, %arg6: memref<1x16x8xf32, #tpu.memory_space<vmem>>, %arg7: memref<1x8x16xf32, #tpu.memory_space<vmem>>) attributes {dimension_semantics = [#tpu.dimension_semantics<parallel>, #tpu.dimension_semantics<parallel>, #tpu.dimension_semantics<parallel>], iteration_bounds = array<i64: 2, 1, 1>, scalar_prefetch = 1 : i64, scratch_operands = 0 : i64, tpu.core_type = #tpu.core_type<tc>, window_params = [{transform_indices = @transform_0, window_bounds = array<i64: 1, 16, 32>}, {transform_indices = @transform_1, window_bounds = array<i64: 1, 8, 32>}, {transform_indices = @transform_2, window_bounds = array<i64: 1, 16, 8>}, {transform_indices = @transform_3, window_bounds = array<i64: 1, 8, 16>}]} {
    %c0 = arith.constant 0 : index
    %0 = memref.load %arg3[%c0] : memref<1xf32, #tpu.memory_space<smem>>
    %c0_0 = arith.constant 0 : index
    %c0_1 = arith.constant 0 : index
    %c0_2 = arith.constant 0 : index
    %1 = vector.load %arg4[%c0_0, %c0_1, %c0_2] : memref<1x16x32xf32, #tpu.memory_space<vmem>>, vector<1x16x32xf32>
    %2 = vector.shape_cast %1 : vector<1x16x32xf32> to vector<16x32xf32>
    %c0_3 = arith.constant 0 : index
    %c0_4 = arith.constant 0 : index
    %c0_5 = arith.constant 0 : index
    %3 = vector.load %arg5[%c0_3, %c0_4, %c0_5] : memref<1x8x32xf32, #tpu.memory_space<vmem>>, vector<1x8x32xf32>
    %4 = vector.shape_cast %3 : vector<1x8x32xf32> to vector<8x32xf32>
    %cst = arith.constant dense<0.000000e+00> : vector<16x8xf32>
    %5 = tpu.matmul %2, %4, %cst {dimension_numbers = #tpu.dot_dimension_numbers<[1], [1], [0], [0], [0, 0, 1, 0], [], []>} : vector<16x32xf32>, vector<8x32xf32>, vector<16x8xf32> -> vector<16x8xf32>
    %cst_6 = arith.constant dense<0.000000e+00> : vector<8x16xf32>
    %6 = tpu.matmul %4, %2, %cst_6 {dimension_numbers = #tpu.dot_dimension_numbers<[1], [1], [0], [0], [0, 0, 1, 0], [], []>} : vector<8x32xf32>, vector<16x32xf32>, vector<8x16xf32> -> vector<8x16xf32>
    %7 = vector.broadcast %0 : f32 to vector<16x8xf32>
    %8 = arith.mulf %7, %5 : vector<16x8xf32>
    %c0_7 = arith.constant 0 : index
    %c0_8 = arith.constant 0 : index
    %c0_9 = arith.constant 0 : index
    %9 = vector.load %arg6[%c0_7, %c0_8, %c0_9] : memref<1x16x8xf32, #tpu.memory_space<vmem>>, vector<1x16x8xf32>
    %10 = vector.shape_cast %9 : vector<1x16x8xf32> to vector<16x8xf32>
    %11 = vector.shape_cast %8 : vector<16x8xf32> to vector<1x16x8xf32>
    tpu.vector_store %arg6[%c0_7, %c0_8, %c0_9], %11 {strides = array<i32>} : memref<1x16x8xf32, #tpu.memory_space<vmem>>, vector<1x16x8xf32>,
    %12 = vector.broadcast %0 : f32 to vector<8x16xf32>
    %13 = arith.mulf %12, %6 : vector<8x16xf32>
    %c0_10 = arith.constant 0 : index
    %c0_11 = arith.constant 0 : index
    %c0_12 = arith.constant 0 : index
    %14 = vector.load %arg7[%c0_10, %c0_11, %c0_12] : memref<1x8x16xf32, #tpu.memory_space<vmem>>, vector<1x8x16xf32>
    %15 = vector.shape_cast %14 : vector<1x8x16xf32> to vector<8x16xf32>
    %16 = vector.shape_cast %13 : vector<8x16xf32> to vector<1x8x16xf32>
    tpu.vector_store %arg7[%c0_10, %c0_11, %c0_12], %16 {strides = array<i32>} : memref<1x8x16xf32, #tpu.memory_space<vmem>>, vector<1x8x16xf32>,
    return
  }
  func.func @transform_0(%arg0: i32, %arg1: i32, %arg2: i32, %arg3: memref<1xf32, #tpu.memory_space<smem>>) -> (i32, i32, i32) {
    %c0_i32 = arith.constant 0 : i32
    %c0_i32_0 = arith.constant 0 : i32
    return %arg0, %arg1, %c0_i32 : i32, i32, i32
  }
  func.func @transform_1(%arg0: i32, %arg1: i32, %arg2: i32, %arg3: memref<1xf32, #tpu.memory_space<smem>>) -> (i32, i32, i32) {
    %c0_i32 = arith.constant 0 : i32
    %c0_i32_0 = arith.constant 0 : i32
    return %arg0, %arg2, %c0_i32 : i32, i32, i32
  }
  func.func @transform_2(%arg0: i32, %arg1: i32, %arg2: i32, %arg3: memref<1xf32, #tpu.memory_space<smem>>) -> (i32, i32, i32) {
    %c0_i32 = arith.constant 0 : i32
    return %arg0, %arg1, %arg2 : i32, i32, i32
  }
  func.func @transform_3(%arg0: i32, %arg1: i32, %arg2: i32, %arg3: memref<1xf32, #tpu.memory_space<smem>>) -> (i32, i32, i32) {
    %c0_i32 = arith.constant 0 : i32
    return %arg0, %arg2, %arg1 : i32, i32, i32
  }
}

</mosaic_0001>

<llo_original>
// kernel: tpu_custom_call.1
$region0: #{tpu_custom_call.1}
  #allocation0 [shape = 'u32[]', space=smem, size = 0x4, offset = 0x4, fixed_abs, tag = 'smem constant byte address 0x4 - core index']
  #allocation1 [shape = 'u32[72,128]{1,0:T(1,128)}', space=vmem, size = 0x9000, scoped, tag = 'internal scratch']
  #allocation2 [shape = 's32[1]{0}', space=sflag, size = 0x4, scoped, tag = 'scoped memory for tpu_custom_call.1']
  #allocation3 [shape = 'f32[1]{0:T(128)S(6)}', space=smem, size = 0x200, scoped, tag = 'prefetched SMEM operand 0']
  %s0 = inlined_call_operand.<no memory space> [shape: f32[1], index: 0, kind: input, shape index: {}]
  %s1 = inlined_call_operand.hbm [shape: f32[2,16,32], index: 1, kind: input, shape index: {}]
  %s2 = inlined_call_operand.hbm [shape: f32[2,8,32], index: 2, kind: input, shape index: {}]
  %s3 = inlined_call_operand.vmem [shape: f32[2,16,8], index: 3, kind: output, shape index: {0}]
  %s4 = inlined_call_operand.hbm [shape: f32[2,8,16], index: 4, kind: output, shape index: {1}]
  %5 = xla_tuple %s3, %s4
  %s6 = sld [smem:[#allocation0]]
  $region57: #{tpu_custom_call.1} parent=0
    _
  %s8 = ssub.s32 1, %s6
  %s9 = scalar_select 0, %s8, %s6
  %10 = sst [smem:[#allocation3]] %s0
  $region1: #{tpu_custom_call.1} parent=0
    #allocation4 [shape = 'u8[16384]{0}', space=vmem, size = 0x4000, scoped, tag = 'input window, operand 1']
    #allocation5 [shape = 's32[2]{0}', space=sflag, size = 0x8, scoped, tag = 'scoped memory for tpu_custom_call.1']
    #allocation6 [shape = 's32[2]{0}', space=sflag, size = 0x8, scoped, tag = 'scoped memory for tpu_custom_call.1']
    #allocation7 [shape = 'u8[8192]{0}', space=vmem, size = 0x2000, scoped, tag = 'input window, operand 2']
    #allocation8 [shape = 's32[2]{0}', space=sflag, size = 0x8, scoped, tag = 'scoped memory for tpu_custom_call.1']
    #allocation9 [shape = 'u8[8192]{0}', space=vmem, size = 0x2000, scoped, tag = 'output window, operand 1']
    %11 = vsyncpa [#allocation5], 0
    %s12 = scalar_lea.sflag [#allocation5], 1
    %13 = vsyncpa %s12, 0
    %14 = vsyncpa [#allocation8], 0
    %s15 = scalar_lea.sflag [#allocation8], 1
    %16 = vsyncpa %s15, 0
    %17 = vsyncpa [#allocation6], 0
    %s18 = scalar_lea.sflag [#allocation6], 1
    %19 = vsyncpa %s18, 0
    loop: start=0, step=1, limit=4
    $region2: #{tpu_custom_call.1} parent=1 // loop_pre_header
      _
    $region3: #{tpu_custom_call.1} parent=1 // loop_header
      %s21 = sphi 0, %s25
      %p22 = scmp.ge.s32.totalorder %s21, 4
      %s28 = sphi 0, %s47
      %s29 = sphi 0, %s43
      %s30 = sphi 0, %s39
      %s31 = sphi 0, %s28
      %s32 = sphi 0, %s29
      %s33 = sphi 0, %s30
      %s34 = sphi 0, %s31
      %s35 = sphi 0, %s32
      %s36 = sphi 0, %s33
      %s52 = sphi 0, %s54
      %s55 = sphi 0, %s52
      %s56 = sphi 0, %s55
      %s72 = sphi 0, %s56
      %s80 = sphi 0, %s82
      %s83 = sphi 0, %s80
      %s84 = sphi 0, %s83
      %s100 = sphi 0, %s84
      %s110 = sphi 0, %s112
      %s113 = sphi 0, %s110
      %s114 = sphi 0, %s113
      %s130 = sphi 0, %s114
      %s140 = sphi 0, %s142
      %s143 = sphi 0, %s140
      %s144 = sphi 0, %s143
      %s160 = sphi 0, %s144
    $region4: #{tpu_custom_call.1} parent=1 // loop_header_branch
      %24 = sbr.rel (%p22) target = $region8
    $region5: #{tpu_custom_call.1} parent=1 // loop_body
      %s26 = ssub.s32 %s21, 1
      %s27 = ssub.s32 %s21, 2
      %s37 = sadd.s32 1, %s30
      %p38 = scmp.ge.s32.totalorder %s37, 1
      %s39 = scalar_select %p38, 0, %s37
      %s40 = sadd.s32 1, %s29
      %s41 = scalar_select %p38, %s40, %s29
      %p42 = scmp.ge.s32.totalorder %s41, 1
      %s43 = scalar_select %p42, 0, %s41
      %s44 = sadd.s32 1, %s28
      %s45 = scalar_select %p42, %s44, %s28
      %p46 = scmp.ge.s32.totalorder %s45, 2
      %s47 = scalar_select %p46, 0, %s45
      %s48 = ssub.s32 %s28, %s47
      %s49 = ssub.s32 %s29, %s43
      %s50 = sor.u32 %s48, %s49
      %p51 = scmp.eq.s32.totalorder %s50, 0
      %s53 = sadd.s32 %s52, 1
      %s54 = scalar_select %p51, %s52, %s53
      %p57 = pneg %p51
      %p58 = scmp.eq.s32.totalorder %s21, 1
      %p59 = por %p57, %p58
      %p60 = scmp.ne.s32.totalorder %s52, %s55
      %p61 = scmp.eq.s32.totalorder %s21, 0
      %p62 = por %p60, %p61
      %p63 = scmp.ne.s32.totalorder %s52, %s55
      %p64 = scmp.eq.s32.totalorder %s26, 1
      %p65 = por %p63, %p64
      %p66 = scmp.ne.s32.totalorder %s55, %s56
      %p67 = scmp.eq.s32.totalorder %s26, 0
      %p68 = por %p66, %p67
      %p69 = scmp.ne.s32.totalorder %s55, %s56
      %p70 = scmp.eq.s32.totalorder %s27, 1
      %p71 = por %p69, %p70
      %p73 = scmp.ne.s32.totalorder %s56, %s72
      %p74 = scmp.eq.s32.totalorder %s27, 0
      %p75 = por %p73, %p74
      %s76 = ssub.s32 %s28, %s47
      %s77 = ssub.s32 %s30, %s39
      %s78 = sor.u32 %s76, %s77
      %p79 = scmp.eq.s32.totalorder %s78, 0
      %s81 = sadd.s32 %s80, 1
      %s82 = scalar_select %p79, %s80, %s81
      %p85 = pneg %p79
      %p86 = scmp.eq.s32.totalorder %s21, 1
      %p87 = por %p85, %p86
      %p88 = scmp.ne.s32.totalorder %s80, %s83
      %p89 = scmp.eq.s32.totalorder %s21, 0
      %p90 = por %p88, %p89
      %p91 = scmp.ne.s32.totalorder %s80, %s83
      %p92 = scmp.eq.s32.totalorder %s26, 1
      %p93 = por %p91, %p92
      %p94 = scmp.ne.s32.totalorder %s83, %s84
      %p95 = scmp.eq.s32.totalorder %s26, 0
      %p96 = por %p94, %p95
      %p97 = scmp.ne.s32.totalorder %s83, %s84
      %p98 = scmp.eq.s32.totalorder %s27, 1
      %p99 = por %p97, %p98
      %p101 = scmp.ne.s32.totalorder %s84, %s100
      %p102 = scmp.eq.s32.totalorder %s27, 0
      %p103 = por %p101, %p102
      %s104 = ssub.s32 %s28, %s47
      %s105 = ssub.s32 %s29, %s43
      %s106 = sor.u32 %s104, %s105
      %s107 = ssub.s32 %s30, %s39
      %s108 = sor.u32 %s106, %s107
      %p109 = scmp.eq.s32.totalorder %s108, 0
      %s111 = sadd.s32 %s110, 1
      %s112 = scalar_select %p109, %s110, %s111
      %p115 = pneg %p109
      %p116 = scmp.eq.s32.totalorder %s21, 1
      %p117 = por %p115, %p116
      %p118 = scmp.ne.s32.totalorder %s110, %s113
      %p119 = scmp.eq.s32.totalorder %s21, 0
      %p120 = por %p118, %p119
      %p121 = scmp.ne.s32.totalorder %s110, %s113
      %p122 = scmp.eq.s32.totalorder %s26, 1
      %p123 = por %p121, %p122
      %p124 = scmp.ne.s32.totalorder %s113, %s114
      %p125 = scmp.eq.s32.totalorder %s26, 0
      %p126 = por %p124, %p125
      %p127 = scmp.ne.s32.totalorder %s113, %s114
      %p128 = scmp.eq.s32.totalorder %s27, 1
      %p129 = por %p127, %p128
      %p131 = scmp.ne.s32.totalorder %s114, %s130
      %p132 = scmp.eq.s32.totalorder %s27, 0
      %p133 = por %p131, %p132
      %s134 = ssub.s32 %s28, %s47
      %s135 = ssub.s32 %s30, %s39
      %s136 = sor.u32 %s134, %s135
      %s137 = ssub.s32 %s29, %s43
      %s138 = sor.u32 %s136, %s137
      %p139 = scmp.eq.s32.totalorder %s138, 0
      %s141 = sadd.s32 %s140, 1
      %s142 = scalar_select %p139, %s140, %s141
      %p145 = pneg %p139
      %p146 = scmp.eq.s32.totalorder %s21, 1
      %p147 = por %p145, %p146
      %p148 = scmp.ne.s32.totalorder %s140, %s143
      %p149 = scmp.eq.s32.totalorder %s21, 0
      %p150 = por %p148, %p149
      %p151 = scmp.ne.s32.totalorder %s140, %s143
      %p152 = scmp.eq.s32.totalorder %s26, 1
      %p153 = por %p151, %p152
      %p154 = scmp.ne.s32.totalorder %s143, %s144
      %p155 = scmp.eq.s32.totalorder %s26, 0
      %p156 = por %p154, %p155
      %p157 = scmp.ne.s32.totalorder %s143, %s144
      %p158 = scmp.eq.s32.totalorder %s27, 1
      %p159 = por %p157, %p158
      %p161 = scmp.ne.s32.totalorder %s144, %s160
      %p162 = scmp.eq.s32.totalorder %s27, 0
      %p163 = por %p161, %p162
      %p164 = scmp.le.s32.totalorder 1, %s21
      %p165 = scmp.lt.s32.totalorder %s21, 3
      %p166 = pnand %p164, %p165
      %p167 = pneg %p166
      // Predicated region
      $region9: #{tpu_custom_call.1} parent=5 // pred_check
        _
      $region10: #{tpu_custom_call.1} parent=5 // pred_check_branch
        %169 = sbr.rel (%p166) target = $region12
      $region11: #{tpu_custom_call.1} parent=5 // pred_region
        %s170 = ssub.s32 %s21, 1
      $region12: #{tpu_custom_call.1} parent=5 // pred_fallthru
        _
      %p171 = scmp.lt.s32.totalorder %s21, 2
      // Predicated region
      $region13: #{tpu_custom_call.1} parent=5 // pred_check
        %p172 = pneg %p171
      $region14: #{tpu_custom_call.1} parent=5 // pred_check_branch
        %174 = sbr.rel (%p172) target = $region16
      $region15: #{tpu_custom_call.1} parent=5 // pred_region
        // Predicated region
        $region17: #{tpu_custom_call.1} parent=15 // pred_check
          %p175 = pneg %p62
        $region18: #{tpu_custom_call.1} parent=15 // pred_check_branch
          %177 = sbr.rel (%p175) target = $region20
        $region19: #{tpu_custom_call.1} parent=15 // pred_region
          %s178 = sand.u32 %s52, 1
          %s179 = scalar_lea.sflag [#allocation5], %s178
          %s180 = sand.u32 %s52, 1
          %s181 = smul.addr %s180, 16
          %s182 = scalar_lea.vmem [#allocation4], %s181
          %s183 = smul.u32 2, %s29
          %185 = vsyncadd %s179, 0
          %s186 = smul.addr %s28, 2
          %s187 = sadd.s32 %s183, %s186
          %s188 = smul.addr %s187, 8
          %s189 = scalar_lea.hbm %s1, %s188
          %s190 = sshll.u32 %s189, 4
          %s191 = int_to_ptr.hbm [resolvable:$true] %s190
          %s192 = sshll.u32 %s182, 4
          %s193 = int_to_ptr.vmem [resolvable:$true] %s192
          %198 = dma.hbm_to_vmem [thread:$0]  %s191, 256, %s193, %s179, 128, 128, 8
        $region20: #{tpu_custom_call.1} parent=15 // pred_fallthru
          _
        // Predicated region
        $region21: #{tpu_custom_call.1} parent=15 // pred_check
          %p199 = pneg %p90
        $region22: #{tpu_custom_call.1} parent=15 // pred_check_branch
          %201 = sbr.rel (%p199) target = $region24
        $region23: #{tpu_custom_call.1} parent=15 // pred_region
          %s202 = sand.u32 %s80, 1
          %s203 = scalar_lea.sflag [#allocation8], %s202
          %s204 = sand.u32 %s80, 1
          %s205 = smul.addr %s204, 8
          %s206 = scalar_lea.vmem [#allocation7], %s205
          %208 = vsyncadd %s203, 0
          %s209 = sadd.s32 %s30, %s28
          %s210 = smul.addr %s209, 8
          %s211 = scalar_lea.hbm %s2, %s210
          %s213 = sshll.u32 %s211, 4
          %s214 = int_to_ptr.hbm [resolvable:$true] %s213
          %s215 = sshll.u32 %s206, 4
          %s216 = int_to_ptr.vmem [resolvable:$true] %s215
          %218 = dma.hbm_to_vmem [thread:$0]  %s214, 128, %s216, %s203
        $region24: #{tpu_custom_call.1} parent=15 // pred_fallthru
          _
      $region16: #{tpu_custom_call.1} parent=5 // pred_fallthru
        _
      %p219 = scmp.le.s32.totalorder 1, %s21
      %p220 = scmp.lt.s32.totalorder %s21, 3
      %p221 = pnand %p219, %p220
      %p222 = pneg %p221
      // Predicated region
      $region25: #{tpu_custom_call.1} parent=5 // pred_check
        _
      $region26: #{tpu_custom_call.1} parent=5 // pred_check_branch
        %224 = sbr.rel (%p221) target = $region28
      $region27: #{tpu_custom_call.1} parent=5 // pred_region
        %s225 = ssub.s32 %s21, 1
        %s226 = sand.u32 %s55, 1
        %s227 = scalar_lea.sflag [#allocation5], %s226
        %s228 = sand.u32 %s55, 1
        %s229 = smul.addr %s228, 16
        %s230 = scalar_lea.vmem [#allocation4], %s229
        // Predicated region
        $region29: #{tpu_custom_call.1} parent=27 // pred_check
          %p231 = pneg %p68
        $region30: #{tpu_custom_call.1} parent=27 // pred_check_branch
          %233 = sbr.rel (%p231) target = $region32
        $region31: #{tpu_custom_call.1} parent=27 // pred_region
          %235 = dma.done %s227, 256
        $region32: #{tpu_custom_call.1} parent=27 // pred_fallthru
          _
        %s236 = sand.u32 %s83, 1
        %s237 = scalar_lea.sflag [#allocation8], %s236
        %s238 = sand.u32 %s83, 1
        %s239 = smul.addr %s238, 8
        %s240 = scalar_lea.vmem [#allocation7], %s239
        // Predicated region
        $region33: #{tpu_custom_call.1} parent=27 // pred_check
          %p241 = pneg %p96
        $region34: #{tpu_custom_call.1} parent=27 // pred_check_branch
          %243 = sbr.rel (%p241) target = $region36
        $region35: #{tpu_custom_call.1} parent=27 // pred_region
          %245 = dma.done %s237, 128
        $region36: #{tpu_custom_call.1} parent=27 // pred_fallthru
          _
        %s246 = sand.u32 %s55, 1
        %s247 = scalar_lea.sflag [#allocation5], %s246
        %s248 = sand.u32 %s55, 1
        %s249 = smul.addr %s248, 16
        %s250 = scalar_lea.vmem [#allocation4], %s249
        %p251 = pneg %p68
        %p252 = pneg %p65
        %s253 = sand.u32 %s83, 1
        %s254 = scalar_lea.sflag [#allocation8], %s253
        %s255 = sand.u32 %s83, 1
        %s256 = smul.addr %s255, 8
        %s257 = scalar_lea.vmem [#allocation7], %s256
        %p258 = pneg %p96
        %p259 = pneg %p93
        %p260 = pneg %p126
        %p261 = pneg %p123
        %s262 = smul.u32 2, %s32
        %p263 = scmp.lt.s32.totalorder %s31, 1
        %s264 = scalar_select %p263, %s31, 1
        %p265 = scmp.lt.s32.totalorder %s262, 1
        %s266 = scalar_select %p265, %s262, 1
        %p267 = scmp.lt.s32.totalorder %s33, 0
        %s268 = scalar_select %p267, %s33, 0
        %s269 = sadd.s32 %s268, %s266
        %s270 = smul.addr %s264, 2
        %s271 = sadd.s32 %s269, %s270
        %s272 = smul.addr %s271, 8
        %s273 = scalar_lea.vmem %s3, %s272
        %p274 = pneg %p156
        %p275 = pneg %p153
        %s276 = sand.u32 %s143, 1
        %s277 = scalar_lea.sflag [#allocation6], %s276
        %s278 = sand.u32 %s143, 1
        %s279 = smul.addr %s278, 8
        %s280 = scalar_lea.vmem [#allocation9], %s279
        %s281 = smul.u32 2, %s32
        %s282 = smul.u32 2, %s32
        %p283 = scmp.lt.s32.totalorder %s31, 1
        %s284 = scalar_select %p283, %s31, 1
        %p285 = scmp.lt.s32.totalorder %s282, 1
        %s286 = scalar_select %p285, %s282, 1
        %p287 = scmp.lt.s32.totalorder %s33, 0
        %s288 = scalar_select %p287, %s33, 0
        %s289 = sadd.s32 %s288, %s286
        %s290 = smul.addr %s284, 2
        %s291 = sadd.s32 %s289, %s290
        %s292 = smul.addr %s291, 8
        %s293 = scalar_lea.vmem %s3, %s292
        %s294 = smul.u32 2, %s32
        %s295 = sld [smem:[#allocation3]]
        %v296 = vld [vmem:[%s230] sm:$0xff]
        %v297 = vld [vmem:[%s230 + $0x8] sm:$0xff]
        %v298 = vld [vmem:[%s240] sm:$0xff]
        %vm299 = vcmask 261120
        %v301 = vsel %vm299, %v296, 0
        %v304 = vsel %vm299, %v297, 0
        %v307 = vsel %vm299, %v298, 0
        %309 = vmatpush.xpose.msra.mxu0 0.0
        %310 = vmatpush.xpose.msra.mxu0 0.0
        %311 = vmatpush.xpose.msra.mxu0 0.0
        %312 = vmatpush.xpose.msra.mxu0 0.0
        %313 = vmatpush.xpose.msra.mxu0 0.0
        %314 = vmatpush.xpose.msra.mxu0 0.0
        %315 = vmatpush.xpose.msra.mxu0 0.0
        %316 = vmatpush.xpose.msra.mxu0 0.0
        %317 = vmatpush.xpose.msra.mxu0 0.0
        %318 = vmatpush.xpose.msra.mxu0 0.0
        %319 = vmatpush.xpose.msra.mxu0 0.0
        %320 = vmatpush.xpose.msra.mxu0 0.0
        %321 = vmatpush.xpose.msra.mxu0 0.0
        %322 = vmatpush.xpose.msra.mxu0 0.0
        %323 = vmatpush.xpose.msra.mxu0 0.0
        %324 = vmatpush.xpose.msra.mxu0 %v307
        %325 = vmatmul.f32.gmra.mxu0 %v301
        %v326 = vpop.f32.mrf.mxu0
        %v327 = vadd.f32 0.0, %v326
        %328 = vmatmul.f32.gmra.mxu0 %v304
        %v329 = vpop.f32.mrf.mxu0
        %v330 = vadd.f32 0.0, %v329
        %331 = vdwg.mxu0
        %332 = vmatpush.xpose.msra.mxu0 0.0
        %333 = vmatpush.xpose.msra.mxu0 0.0
        %334 = vmatpush.xpose.msra.mxu0 0.0
        %335 = vmatpush.xpose.msra.mxu0 0.0
        %336 = vmatpush.xpose.msra.mxu0 0.0
        %337 = vmatpush.xpose.msra.mxu0 0.0
        %338 = vmatpush.xpose.msra.mxu0 0.0
        %339 = vmatpush.xpose.msra.mxu0 0.0
        %340 = vmatpush.xpose.msra.mxu0 0.0
        %341 = vmatpush.xpose.msra.mxu0 0.0
        %342 = vmatpush.xpose.msra.mxu0 0.0
        %343 = vmatpush.xpose.msra.mxu0 0.0
        %344 = vmatpush.xpose.msra.mxu0 0.0
        %345 = vmatpush.xpose.msra.mxu0 0.0
        %346 = vmatpush.xpose.msra.mxu0 %v304
        %347 = vmatpush.xpose.msra.mxu0 %v301
        %348 = vmatmul.f32.gmra.mxu0 %v307
        %v349 = vpop.f32.mrf.mxu0
        %v350 = vadd.f32 0.0, %v349
        %351 = vdwg.mxu0
        %v352 = vstv %s295
        %v353 = vmul.f32 %v352, %v327
        %v354 = vmul.f32 %v352, %v330
        %vm355 = vcmask 64512
        %356 = vst.msk [vmem:[%s293] sm:$0xff] %vm355, %v353
        %357 = vst.msk [vmem:[%s293 + $0x8] sm:$0xff] %vm355, %v354
        %v358 = vmul.f32 %v352, %v350
        %vm359 = vcmask 130048
        %360 = vst.msk [vmem:[%s280] sm:$0xff] %vm359, %v358
        %s361 = smul.u32 2, %s32
        %p362 = scmp.lt.s32.totalorder %s31, 1
        %s363 = scalar_select %p362, %s31, 1
        %p364 = scmp.lt.s32.totalorder %s361, 1
        %s365 = scalar_select %p364, %s361, 1
        %p366 = scmp.lt.s32.totalorder %s33, 0
        %s367 = scalar_select %p366, %s33, 0
        %s368 = sadd.s32 %s367, %s365
        %s369 = smul.addr %s363, 2
        %s370 = sadd.s32 %s368, %s369
        %s371 = smul.addr %s370, 8
        %s372 = scalar_lea.vmem %s3, %s371
        %s373 = sand.u32 %s143, 1
        %s374 = scalar_lea.sflag [#allocation6], %s373
        %s375 = sand.u32 %s143, 1
        %s376 = smul.addr %s375, 8
        %s377 = scalar_lea.vmem [#allocation9], %s376
        // Predicated region
        $region37: #{tpu_custom_call.1} parent=27 // pred_check
          %p378 = pneg %p123
        $region38: #{tpu_custom_call.1} parent=27 // pred_check_branch
          %380 = sbr.rel (%p378) target = $region40
        $region39: #{tpu_custom_call.1} parent=27 // pred_region
          %s381 = smul.u32 2, %s32
        $region40: #{tpu_custom_call.1} parent=27 // pred_fallthru
          _
        // Predicated region
        $region41: #{tpu_custom_call.1} parent=27 // pred_check
          %p382 = pneg %p153
        $region42: #{tpu_custom_call.1} parent=27 // pred_check_branch
          %384 = sbr.rel (%p382) target = $region44
        $region43: #{tpu_custom_call.1} parent=27 // pred_region
          %386 = vsyncadd %s374, 0
          %s387 = sadd.s32 %s32, %s33
          %s388 = sadd.s32 %s387, %s31
          %s389 = smul.addr %s388, 8
          %s390 = scalar_lea.hbm %s4, %s389
          %s392 = sshll.u32 %s377, 4
          %s393 = int_to_ptr.vmem [resolvable:$true] %s392
          %s394 = sshll.u32 %s390, 4
          %s395 = int_to_ptr.hbm [resolvable:$true] %s394
          %397 = dma.vmem_to_hbm [thread:$0]  %s393, 128, %s395, %s374
        $region44: #{tpu_custom_call.1} parent=27 // pred_fallthru
          _
      $region28: #{tpu_custom_call.1} parent=5 // pred_fallthru
        _
      %p398 = scmp.le.s32.totalorder 2, %s21
      // Predicated region
      $region45: #{tpu_custom_call.1} parent=5 // pred_check
        %p399 = pneg %p398
      $region46: #{tpu_custom_call.1} parent=5 // pred_check_branch
        %401 = sbr.rel (%p399) target = $region48
      $region47: #{tpu_custom_call.1} parent=5 // pred_region
        %s402 = ssub.s32 %s21, 2
        // Predicated region
        $region49: #{tpu_custom_call.1} parent=47 // pred_check
          %p403 = pneg %p129
        $region50: #{tpu_custom_call.1} parent=47 // pred_check_branch
          %405 = sbr.rel (%p403) target = $region52
        $region51: #{tpu_custom_call.1} parent=47 // pred_region
          %s406 = smul.u32 2, %s35
          %p407 = scmp.lt.s32.totalorder %s34, 1
          %s408 = scalar_select %p407, %s34, 1
          %p409 = scmp.lt.s32.totalorder %s406, 1
          %s410 = scalar_select %p409, %s406, 1
          %p411 = scmp.lt.s32.totalorder %s36, 0
          %s412 = scalar_select %p411, %s36, 0
          %s413 = sadd.s32 %s412, %s410
          %s414 = smul.addr %s408, 2
          %s415 = sadd.s32 %s413, %s414
          %s416 = smul.addr %s415, 8
          %s417 = scalar_lea.vmem %s3, %s416
        $region52: #{tpu_custom_call.1} parent=47 // pred_fallthru
          _
        // Predicated region
        $region53: #{tpu_custom_call.1} parent=47 // pred_check
          %p418 = pneg %p159
        $region54: #{tpu_custom_call.1} parent=47 // pred_check_branch
          %420 = sbr.rel (%p418) target = $region56
        $region55: #{tpu_custom_call.1} parent=47 // pred_region
          %s421 = sand.u32 %s144, 1
          %s422 = scalar_lea.sflag [#allocation6], %s421
          %s423 = sand.u32 %s144, 1
          %s424 = smul.addr %s423, 8
          %s425 = scalar_lea.vmem [#allocation9], %s424
          %427 = dma.done %s422, 128
        $region56: #{tpu_custom_call.1} parent=47 // pred_fallthru
          _
      $region48: #{tpu_custom_call.1} parent=5 // pred_fallthru
        _
    $region6: #{tpu_custom_call.1} parent=1 // loop_footer
      %s25 = sadd.s32 1, %s21
    $region7: #{tpu_custom_call.1} parent=1 // loop_footer_branch
      %20 = sbr.rel target = $region3
    $region8: #{tpu_custom_call.1} parent=1 // loop_exit
      _
    %428 = vsyncpa [#allocation5], 1
    %s429 = scalar_lea.sflag [#allocation5], 1
    %430 = vsyncpa %s429, 1
    %431 = vsyncpa [#allocation8], 1
    %s432 = scalar_lea.sflag [#allocation8], 1
    %433 = vsyncpa %s432, 1
    %434 = vsyncpa [#allocation6], 1
    %s435 = scalar_lea.sflag [#allocation6], 1
    %436 = vsyncpa %s435, 1

</llo_original>
